<compile_context>
chip_gen: v5e
topology: v5e:2x2
jax: 0.10.0
libtpu: 0.0.40
codegen_flags: <defaults>
</compile_context>

<pallas_src>
import jax
import jax.numpy as jnp
from jax.experimental import pallas as pl
from jax.experimental.pallas import tpu as pltpu

EPS_PPO = 1e-5
GAMMA = 0.99


def _choose_batch_tile(B):
    # TB must divide B and either equal B or be a multiple of 8 (sublanes) for
    # the (TB, D) / (TB, 3) BlockSpecs.  Kept small enough that
    # 2 * TB * D * bf16 * double-buffering stays far under v7x's 64 MiB VMEM.
    if B <= 512:
        return B
    for tb in (512, 256, 128, 64, 32, 16, 8):
        if B % tb == 0:
            return tb
    return B


@jax.jit
def dqn_update_fused(state, next_state, w_main, b_main, w_target, b_target,
                     actions, rewards, masks, returns, value_preds):
    """Returns (smooth-L1 DQN loss scalar, normalized advantages (T, N))."""
    B, D = state.shape
    A = w_main.shape[1]
    TB = _choose_batch_tile(B)
    nt = B // TB

    # ---------------- wrapper-side layout plumbing (fused by XLA) ----------
    # Per-tile interleave so each grid step gets [state_tile ; next_state_tile]
    # as one contiguous (2*TB, D) bf16 block -> a single fused MXU matmul.
    xcat = jnp.concatenate(
        [state.reshape(nt, TB, D), next_state.reshape(nt, TB, D)],
        axis=1).astype(jnp.bfloat16)                                  # (nt, 2TB, D)
    wcat = jnp.concatenate([w_main, w_target], axis=1).astype(jnp.bfloat16)  # (D, 2A)
    bcat = jnp.concatenate([b_main, b_target], axis=1).astype(jnp.float32)   # (1, 2A)
    # actions / rewards / masks -> one DMA instead of three tiny ones.
    packed = jnp.concatenate([actions.astype(jnp.float32),
                              rewards.astype(jnp.float32),
                              masks.astype(jnp.float32)], axis=1)            # (B, 3)

    Tp1, N = returns.shape
    T = Tp1 - 1
    if T % 8 == 0:
        ret_in, val_in = returns, value_preds   # [:-1] done by the BlockSpec
    else:
        ret_in, val_in = returns[:-1], value_preds[:-1]   # fallback XLA slice

    def kernel(xcat_ref, wcat_ref, bcat_ref, packed_ref, ret_ref, val_ref,
               loss_ref, adv_ref, acc_ref):
        i = pl.program_id(0)

        @pl.when(i == 0)
        def _init_and_advantages():
            acc_ref[0] = jnp.float32(0.0)
            # get_advantages(): (ret - val - mean) / (unbiased std + eps)
            adv = ret_ref[...] - val_ref[...]                        # (T, N) f32
            n = adv.size
            mean = jnp.sum(adv) / jnp.float32(n)
            centered = adv - mean
            var = jnp.sum(centered * centered) / jnp.float32(max(n - 1, 1))
            adv_ref[...] = centered / (jnp.sqrt(var) + EPS_PPO)

        # -------- fused Q-heads: one MXU pass for main + target nets -------
        x = xcat_ref[0]                                              # (2TB, D) bf16
        qtq = jnp.dot(x, wcat_ref[...],
                      preferred_element_type=jnp.float32) + bcat_ref[...]
        q_rows = qtq[:TB]     # rows: state      | cols [0, A)  = main-net Q
        t_rows = qtq[TB:]     # rows: next_state | cols [A, 2A) = target-net Q

        p = packed_ref[...]                                          # (TB, 3) f32
        acts = p[:, 0:1].astype(jnp.int32)                           # (TB, 1)
        rew = p[:, 1:2]                                              # (TB, 1)
        msk = p[:, 2:3]                                              # (TB, 1)

        col = jax.lax.broadcasted_iota(jnp.int32, (TB, 2 * A), 1)
        # gather(1, actions): actions index the main-net columns [0, A).
        onehot = col == acts
        state_values = jnp.sum(jnp.where(onehot, q_rows, 0.0),
                               axis=1, keepdims=True)                # (TB, 1)
        # max over target-net columns only (-inf elsewhere).
        t_masked = jnp.where(col >= A, t_rows, -jnp.inf)
        next_max = jnp.max(t_masked, axis=1, keepdims=True)          # (TB, 1)
        # masks must be {0,1}: mask-gated max == PyTorch index_put of non-final max.
        next_state_values = msk * next_max
        expected = next_state_values * GAMMA + rew

        # smooth_l1 (Huber, beta=1.0); accumulate the sum across batch tiles.
        d = state_values - expected
        ad = jnp.abs(d)
        huber = jnp.where(ad < 1.0, 0.5 * d * d, ad - 0.5)
        acc_ref[0] = acc_ref[0] + jnp.sum(huber)

        @pl.when(i == pl.num_programs(0) - 1)
        def _finalize():
            loss_ref[0, 0] = acc_ref[0] / jnp.float32(B)   # mean over FULL batch

    loss, adv = pl.pallas_call(
        kernel,
        out_shape=(jax.ShapeDtypeStruct((1, 1), jnp.float32),
                   jax.ShapeDtypeStruct((T, N), jnp.float32)),
        grid=(nt,),
        in_specs=[
            pl.BlockSpec((1, 2 * TB, D), lambda i: (i, 0, 0)),   # packed states
            pl.BlockSpec((D, 2 * A), lambda i: (0, 0)),          # fused weights
            pl.BlockSpec((1, 2 * A), lambda i: (0, 0)),          # fused bias
            pl.BlockSpec((TB, 3), lambda i: (i, 0)),             # act/rew/mask
            pl.BlockSpec((T, N), lambda i: (0, 0)),              # returns[:-1]
            pl.BlockSpec((T, N), lambda i: (0, 0)),              # value_preds[:-1]
        ],
        out_specs=(
            pl.BlockSpec(memory_space=pltpu.MemorySpace.SMEM),   # scalar loss
            pl.BlockSpec((T, N), lambda i: (0, 0)),              # advantages
        ),
        scratch_shapes=[pltpu.SMEM((1,), jnp.float32)],          # Huber-sum acc
        compiler_params=pltpu.CompilerParams(
            dimension_semantics=("arbitrary",),   # loss accumulates over tiles
            vmem_limit_bytes=32 * 1024 * 1024),
    )(xcat, wcat, bcat, packed, ret_in, val_in)

    return loss[0, 0], adv


# TODO(synk): the Adam optimizer step, backward pass, clip_grad_norm_ and the
# replay-buffer minibatch generator in DQN.update() are training-framework
# glue with no Pallas forward-pass equivalent and are intentionally omitted.


if __name__ == "__main__":
    key = jax.random.PRNGKey(0)
    ks = jax.random.split(key, 10)

    B, D, A = 8, 32, 8        # minibatch, feature dim, num actions
    Tp1, N = 9, 4             # rollout steps + 1, num envs

    # Synthetic main / target Q-nets (deterministic single linear heads).
    w_main = jax.random.normal(ks[0], (D, A), jnp.float32) * 0.1
    b_main = jax.random.normal(ks[1], (1, A), jnp.float32) * 0.1
    w_target = jax.random.normal(ks[2], (D, A), jnp.float32) * 0.1
    b_target = jax.random.normal(ks[3], (1, A), jnp.float32) * 0.1

    # Synthetic minibatch sample.
    state = jax.random.normal(ks[4], (B, D), jnp.float32)
    next_state = jax.random.normal(ks[5], (B, D), jnp.float32)
    actions = jax.random.randint(ks[6], (B, 1), 0, A, jnp.int32)
    rewards = jax.random.normal(ks[7], (B, 1), jnp.float32)
    masks = (jax.random.uniform(ks[8], (B, 1)) > 0.2).astype(jnp.float32)

    # Synthetic rollout returns / value predictions.
    returns = jax.random.normal(ks[9], (Tp1, N), jnp.float32)
    value_preds = jax.random.normal(jax.random.fold_in(key, 99),
                                    (Tp1, N), jnp.float32)

    loss, adv = dqn_update_fused(state, next_state, w_main, b_main,
                                 w_target, b_target, actions, rewards, masks,
                                 returns, value_preds)
    jax.block_until_ready((loss, adv))
    print("KERNEL_OK")
</pallas_src>

<mosaic_0001>
module attributes {stable_mosaic.version = 11 : i64} {
  func.func @kernel(%arg0: i32, %arg1: memref<1x16x32xbf16, #tpu.memory_space<vmem>>, %arg2: memref<32x16xbf16, #tpu.memory_space<vmem>>, %arg3: memref<1x16xf32, #tpu.memory_space<vmem>>, %arg4: memref<8x3xf32, #tpu.memory_space<vmem>>, %arg5: memref<8x4xf32, #tpu.memory_space<vmem>>, %arg6: memref<8x4xf32, #tpu.memory_space<vmem>>, %arg7: memref<1x1xf32, #tpu.memory_space<smem>>, %arg8: memref<8x4xf32, #tpu.memory_space<vmem>>, %arg9: memref<1xf32, #tpu.memory_space<smem>>) attributes {dimension_semantics = [#tpu.dimension_semantics<arbitrary>], iteration_bounds = array<i64: 1>, scalar_prefetch = 0 : i64, scratch_operands = 1 : i64, tpu.core_type = #tpu.core_type<tc>, window_params = [{transform_indices = @transform_0, window_bounds = array<i64: 1, 16, 32>}, {pipeline_mode = #tpu.pipeline_mode<synchronous>, transform_indices = @transform_1, window_bounds = array<i64: 32, 16>}, {pipeline_mode = #tpu.pipeline_mode<synchronous>, transform_indices = @transform_2, window_bounds = array<i64: 1, 16>}, {transform_indices = @transform_3, window_bounds = array<i64: 8, 3>}, {transform_indices = @transform_4, window_bounds = array<i64: 8, 4>}, {transform_indices = @transform_5, window_bounds = array<i64: 8, 4>}, {transform_indices = @transform_6, window_bounds = array<i64: 1, 1>}, {pipeline_mode = #tpu.pipeline_mode<synchronous>, transform_indices = @transform_7, window_bounds = array<i64: 8, 4>}]} {
    %c0_i32 = arith.constant 0 : i32
    %0 = arith.cmpi eq, %arg0, %c0_i32 : i32
    %1 = arith.extui %0 : i1 to i32
    %c0_i32_0 = arith.constant 0 : i32
    %2 = arith.cmpi ne, %1, %c0_i32_0 : i32
    scf.if %2 {
      %cst_22 = arith.constant 0.000000e+00 : f32
      %c0_23 = arith.constant 0 : index
      %54 = memref.load %arg9[%c0_23] : memref<1xf32, #tpu.memory_space<smem>>
      memref.store %cst_22, %arg9[%c0_23] : memref<1xf32, #tpu.memory_space<smem>>
      %c0_24 = arith.constant 0 : index
      %c0_25 = arith.constant 0 : index
      %55 = vector.load %arg5[%c0_24, %c0_25] : memref<8x4xf32, #tpu.memory_space<vmem>>, vector<8x4xf32>
      %c0_26 = arith.constant 0 : index
      %c0_27 = arith.constant 0 : index
      %56 = vector.load %arg6[%c0_26, %c0_27] : memref<8x4xf32, #tpu.memory_space<vmem>>, vector<8x4xf32>
      %57 = arith.subf %55, %56 : vector<8x4xf32>
      %58 = vector.shape_cast %57 : vector<8x4xf32> to vector<1x8x4xf32>
      %cst_28 = arith.constant dense<0.000000e+00> : vector<1xf32>
      %59 = vector.multi_reduction <add>, %58, %cst_28 [1, 2] : vector<1x8x4xf32> to vector<1xf32>
      %60 = vector.shape_cast %59 : vector<1xf32> to vector<1x1x1xf32>
      %61 = vector.extract %60[0, 0, 0] : f32 from vector<1x1x1xf32>
      %cst_29 = arith.constant 3.200000e+01 : f32
      %62 = arith.divf %61, %cst_29 : f32
      %63 = vector.broadcast %62 : f32 to vector<8x4xf32>
      %64 = arith.subf %57, %63 : vector<8x4xf32>
      %65 = arith.mulf %64, %64 : vector<8x4xf32>
      %66 = vector.shape_cast %65 : vector<8x4xf32> to vector<1x8x4xf32>
      %cst_30 = arith.constant dense<0.000000e+00> : vector<1xf32>
      %67 = vector.multi_reduction <add>, %66, %cst_30 [1, 2] : vector<1x8x4xf32> to vector<1xf32>
      %68 = vector.shape_cast %67 : vector<1xf32> to vector<1x1x1xf32>
      %69 = vector.extract %68[0, 0, 0] : f32 from vector<1x1x1xf32>
      %cst_31 = arith.constant 3.100000e+01 : f32
      %70 = arith.divf %69, %cst_31 : f32
      %71 = math.sqrt %70 : f32
      %cst_32 = arith.constant 9.99999974E-6 : f32
      %72 = arith.addf %71, %cst_32 : f32
      %73 = vector.broadcast %72 : f32 to vector<8x4xf32>
      %74 = arith.divf %64, %73 : vector<8x4xf32>
      %c0_33 = arith.constant 0 : index
      %c0_34 = arith.constant 0 : index
      %75 = vector.load %arg8[%c0_33, %c0_34] : memref<8x4xf32, #tpu.memory_space<vmem>>, vector<8x4xf32>
      tpu.vector_store %arg8[%c0_33, %c0_34], %74 {strides = array<i32>} : memref<8x4xf32, #tpu.memory_space<vmem>>, vector<8x4xf32>,
    } else {
    }
    %c0 = arith.constant 0 : index
    %c0_1 = arith.constant 0 : index
    %c0_2 = arith.constant 0 : index
    %3 = vector.load %arg1[%c0, %c0_1, %c0_2] : memref<1x16x32xbf16, #tpu.memory_space<vmem>>, vector<1x16x32xbf16>
    %4 = vector.shape_cast %3 : vector<1x16x32xbf16> to vector<16x32xbf16>
    %c0_3 = arith.constant 0 : index
    %c0_4 = arith.constant 0 : index
    %5 = vector.load %arg2[%c0_3, %c0_4] : memref<32x16xbf16, #tpu.memory_space<vmem>>, vector<32x16xbf16>
    %cst = arith.constant dense<0.000000e+00> : vector<16x16xf32>
    %6 = tpu.matmul %4, %5, %cst {dimension_numbers = #tpu.dot_dimension_numbers<[1], [0], [0], [1], [0, 0, 1, 1], [], []>} : vector<16x32xbf16>, vector<32x16xbf16>, vector<16x16xf32> -> vector<16x16xf32>
    %c0_5 = arith.constant 0 : index
    %c0_6 = arith.constant 0 : index
    %7 = vector.load %arg3[%c0_5, %c0_6] : memref<1x16xf32, #tpu.memory_space<vmem>>, vector<1x16xf32>
    %8 = vector.broadcast %7 : vector<1x16xf32> to vector<16x16xf32>
    %9 = arith.addf %6, %8 : vector<16x16xf32>
    %10 = vector.extract_strided_slice %9 {offsets = [0, 0], sizes = [8, 16], strides = [1, 1]} : vector<16x16xf32> to vector<8x16xf32>
    %11 = vector.extract_strided_slice %9 {offsets = [8, 0], sizes = [8, 16], strides = [1, 1]} : vector<16x16xf32> to vector<8x16xf32>
    %c0_7 = arith.constant 0 : index
    %c0_8 = arith.constant 0 : index
    %12 = vector.load %arg4[%c0_7, %c0_8] : memref<8x3xf32, #tpu.memory_space<vmem>>, vector<8x3xf32>
    %13 = vector.extract_strided_slice %12 {offsets = [0, 0], sizes = [8, 1], strides = [1, 1]} : vector<8x3xf32> to vector<8x1xf32>
    %14 = arith.fptosi %13 : vector<8x1xf32> to vector<8x1xi32>
    %15 = vector.extract_strided_slice %12 {offsets = [0, 1], sizes = [8, 1], strides = [1, 1]} : vector<8x3xf32> to vector<8x1xf32>
    %16 = vector.extract_strided_slice %12 {offsets = [0, 2], sizes = [8, 1], strides = [1, 1]} : vector<8x3xf32> to vector<8x1xf32>
    %17 = tpu.iota {dimensions = array<i32: 1>} : vector<8x16xi32>
    %18 = vector.broadcast %14 : vector<8x1xi32> to vector<8x16xi32>
    %19 = arith.cmpi eq, %17, %18 : vector<8x16xi32>
    %cst_9 = arith.constant 0.000000e+00 : f32
    %20 = vector.broadcast %cst_9 : f32 to vector<8x16xf32>
    %21 = arith.select %19, %10, %20 : vector<8x16xi1>, vector<8x16xf32>
    %cst_10 = arith.constant dense<0.000000e+00> : vector<8xf32>
    %22 = vector.multi_reduction <add>, %21, %cst_10 [1] : vector<8x16xf32> to vector<8xf32>
    %23 = vector.shape_cast %22 : vector<8xf32> to vector<8x1xf32>
    %c8_i32 = arith.constant 8 : i32
    %24 = vector.broadcast %c8_i32 : i32 to vector<8x16xi32>
    %25 = arith.cmpi sge, %17, %24 : vector<8x16xi32>
    %cst_11 = arith.constant 0xFF800000 : f32
    %26 = vector.broadcast %cst_11 : f32 to vector<8x16xf32>
    %27 = arith.select %25, %11, %26 : vector<8x16xi1>, vector<8x16xf32>
    %cst_12 = arith.constant dense<0xFF800000> : vector<8xf32>
    %28 = vector.multi_reduction <maximumf>, %27, %cst_12 [1] : vector<8x16xf32> to vector<8xf32>
    %29 = vector.shape_cast %28 : vector<8xf32> to vector<8x1xf32>
    %30 = arith.mulf %16, %29 : vector<8x1xf32>
    %cst_13 = arith.constant 9.900000e-01 : f32
    %31 = vector.broadcast %cst_13 : f32 to vector<8x1xf32>
    %32 = arith.mulf %30, %31 : vector<8x1xf32>
    %33 = arith.addf %32, %15 : vector<8x1xf32>
    %34 = arith.subf %23, %33 : vector<8x1xf32>
    %35 = math.absf %34 : vector<8x1xf32>
    %cst_14 = arith.constant 1.000000e+00 : f32
    %36 = vector.broadcast %cst_14 : f32 to vector<8x1xf32>
    %37 = arith.cmpf olt, %35, %36 : vector<8x1xf32>
    %cst_15 = arith.constant 5.000000e-01 : f32
    %38 = vector.broadcast %cst_15 : f32 to vector<8x1xf32>
    %39 = arith.mulf %38, %34 : vector<8x1xf32>
    %40 = arith.mulf %39, %34 : vector<8x1xf32>
    %cst_16 = arith.constant 5.000000e-01 : f32
    %41 = vector.broadcast %cst_16 : f32 to vector<8x1xf32>
    %42 = arith.subf %35, %41 : vector<8x1xf32>
    %43 = arith.select %37, %40, %42 : vector<8x1xi1>, vector<8x1xf32>
    %c0_17 = arith.constant 0 : index
    %44 = memref.load %arg9[%c0_17] : memref<1xf32, #tpu.memory_space<smem>>
    %45 = vector.shape_cast %43 : vector<8x1xf32> to vector<1x8x1xf32>
    %cst_18 = arith.constant dense<0.000000e+00> : vector<1xf32>
    %46 = vector.multi_reduction <add>, %45, %cst_18 [1, 2] : vector<1x8x1xf32> to vector<1xf32>
    %47 = vector.shape_cast %46 : vector<1xf32> to vector<1x1x1xf32>
    %48 = vector.extract %47[0, 0, 0] : f32 from vector<1x1x1xf32>
    %49 = arith.addf %44, %48 : f32
    %c0_19 = arith.constant 0 : index
    %50 = memref.load %arg9[%c0_19] : memref<1xf32, #tpu.memory_space<smem>>
    memref.store %49, %arg9[%c0_19] : memref<1xf32, #tpu.memory_space<smem>>
    %c0_i32_20 = arith.constant 0 : i32
    %51 = arith.cmpi eq, %arg0, %c0_i32_20 : i32
    %52 = arith.extui %51 : i1 to i32
    %c0_i32_21 = arith.constant 0 : i32
    %53 = arith.cmpi ne, %52, %c0_i32_21 : i32
    scf.if %53 {
      %c0_22 = arith.constant 0 : index
      %54 = memref.load %arg9[%c0_22] : memref<1xf32, #tpu.memory_space<smem>>
      %cst_23 = arith.constant 8.000000e+00 : f32
      %55 = arith.divf %54, %cst_23 : f32
      %c0_24 = arith.constant 0 : index
      %c0_25 = arith.constant 0 : index
      %56 = memref.load %arg7[%c0_24, %c0_25] : memref<1x1xf32, #tpu.memory_space<smem>>
      memref.store %55, %arg7[%c0_24, %c0_25] : memref<1x1xf32, #tpu.memory_space<smem>>
    } else {
    }
    return
  }
  func.func @transform_0(%arg0: i32) -> (i32, i32, i32) {
    %c0_i32 = arith.constant 0 : i32
    %c0_i32_0 = arith.constant 0 : i32
    %c0_i32_1 = arith.constant 0 : i32
    return %arg0, %c0_i32, %c0_i32_0 : i32, i32, i32
  }
  func.func @transform_1(%arg0: i32) -> (i32, i32) {
    %c0_i32 = arith.constant 0 : i32
    %c0_i32_0 = arith.constant 0 : i32
    %c0_i32_1 = arith.constant 0 : i32
    return %c0_i32, %c0_i32_0 : i32, i32
  }
  func.func @transform_2(%arg0: i32) -> (i32, i32) {
    %c0_i32 = arith.constant 0 : i32
    %c0_i32_0 = arith.constant 0 : i32
    %c0_i32_1 = arith.constant 0 : i32
    return %c0_i32, %c0_i32_0 : i32, i32
  }
  func.func @transform_3(%arg0: i32) -> (i32, i32) {
    %c0_i32 = arith.constant 0 : i32
    %c0_i32_0 = arith.constant 0 : i32
    return %arg0, %c0_i32 : i32, i32
  }
  func.func @transform_4(%arg0: i32) -> (i32, i32) {
    %c0_i32 = arith.constant 0 : i32
    %c0_i32_0 = arith.constant 0 : i32
    %c0_i32_1 = arith.constant 0 : i32
    return %c0_i32, %c0_i32_0 : i32, i32
  }
  func.func @transform_5(%arg0: i32) -> (i32, i32) {
    %c0_i32 = arith.constant 0 : i32
    %c0_i32_0 = arith.constant 0 : i32
    %c0_i32_1 = arith.constant 0 : i32
    return %c0_i32, %c0_i32_0 : i32, i32
  }
  func.func @transform_6(%arg0: i32) -> (i32, i32) {
    %c0_i32 = arith.constant 0 : i32
    %c0_i32_0 = arith.constant 0 : i32
    %c0_i32_1 = arith.constant 0 : i32
    return %c0_i32, %c0_i32_0 : i32, i32
  }
  func.func @transform_7(%arg0: i32) -> (i32, i32) {
    %c0_i32 = arith.constant 0 : i32
    %c0_i32_0 = arith.constant 0 : i32
    %c0_i32_1 = arith.constant 0 : i32
    return %c0_i32, %c0_i32_0 : i32, i32
  }
}

</mosaic_0001>

<llo_original>
// kernel: dqn_update_fused.1
$region0: #{dqn_update_fused.1}
  #allocation0 [shape = 'u32[]', space=smem, size = 0x4, offset = 0x4, fixed_abs, tag = 'smem constant byte address 0x4 - core index']
  #allocation1 [shape = 'u32[72,128]{1,0:T(1,128)}', space=vmem, size = 0x9000, scoped, tag = 'internal scratch']
  #allocation2 [shape = 'f32[1]{0:T(128)}', space=smem, size = 0x200, scoped, tag = 'scratch operand']
  %s0 = inlined_call_operand.vmem [shape: bf16[1,16,32], index: 0, kind: input, shape index: {}]
  %s1 = inlined_call_operand.vmem [shape: bf16[32,16], index: 1, kind: input, shape index: {}]
  %s2 = inlined_call_operand.vmem [shape: f32[1,16], index: 2, kind: input, shape index: {}]
  %s3 = inlined_call_operand.vmem [shape: f32[8,3], index: 3, kind: input, shape index: {}]
  %s4 = inlined_call_operand.vmem [shape: f32[9,4], index: 4, kind: input, shape index: {}]
  %s5 = inlined_call_operand.vmem [shape: f32[9,4], index: 5, kind: input, shape index: {}]
  %s6 = inlined_call_operand.hbm [shape: f32[1,1], index: 6, kind: output, shape index: {0}]
  %s7 = inlined_call_operand.vmem [shape: f32[8,4], index: 7, kind: output, shape index: {1}]
  %8 = xla_tuple %s6, %s7
  %s9 = sld [smem:[#allocation0]]
  $region50: #{dqn_update_fused.1} parent=0
    _
  %s11 = ssub.s32 1, %s9
  %s12 = scalar_select 0, %s11, %s9
  $region1: #{dqn_update_fused.1} parent=0
    #allocation3 [shape = 'u8[512]{0}', space=smem, size = 0x200, scoped, tag = 'output window, operand 0, single buffered']
    #allocation4 [shape = 's32[1]{0}', space=sflag, size = 0x4, scoped, tag = 'scoped memory for dqn_update_fused.1']
    %13 = vsyncpa [#allocation4], 0
    // Predicated region
    $region2: #{dqn_update_fused.1} parent=1 // pred_check
      _
    $region3: #{dqn_update_fused.1} parent=1 // pred_check_branch
      %15 = sbr.rel (0) target = $region5
    $region4: #{dqn_update_fused.1} parent=1 // pred_region
      _
    $region5: #{dqn_update_fused.1} parent=1 // pred_fallthru
      _
    // Predicated region
    $region6: #{dqn_update_fused.1} parent=1 // pred_check
      _
    $region7: #{dqn_update_fused.1} parent=1 // pred_check_branch
      %17 = sbr.rel (0) target = $region9
    $region8: #{dqn_update_fused.1} parent=1 // pred_region
      _
    $region9: #{dqn_update_fused.1} parent=1 // pred_fallthru
      _
    // Predicated region
    $region10: #{dqn_update_fused.1} parent=1 // pred_check
      _
    $region11: #{dqn_update_fused.1} parent=1 // pred_check_branch
      %19 = sbr.rel (0) target = $region13
    $region12: #{dqn_update_fused.1} parent=1 // pred_region
      _
    $region13: #{dqn_update_fused.1} parent=1 // pred_fallthru
      _
    // Predicated region
    $region14: #{dqn_update_fused.1} parent=1 // pred_check
      _
    $region15: #{dqn_update_fused.1} parent=1 // pred_check_branch
      %21 = sbr.rel (0) target = $region17
    $region16: #{dqn_update_fused.1} parent=1 // pred_region
      _
    $region17: #{dqn_update_fused.1} parent=1 // pred_fallthru
      _
    // Predicated region
    $region18: #{dqn_update_fused.1} parent=1 // pred_check
      _
    $region19: #{dqn_update_fused.1} parent=1 // pred_check_branch
      %23 = sbr.rel (0) target = $region21
    $region20: #{dqn_update_fused.1} parent=1 // pred_region
      _
    $region21: #{dqn_update_fused.1} parent=1 // pred_fallthru
      _
    // Predicated region
    $region22: #{dqn_update_fused.1} parent=1 // pred_check
      _
    $region23: #{dqn_update_fused.1} parent=1 // pred_check_branch
      %25 = sbr.rel (0) target = $region25
    $region24: #{dqn_update_fused.1} parent=1 // pred_region
      _
    $region25: #{dqn_update_fused.1} parent=1 // pred_fallthru
      _
    %p27 = scmp.eq.s32.totalorder 0, 0
    // Predicated region
    $region26: #{dqn_update_fused.1} parent=1 // pred_check
      %p28 = pneg %p27
    $region27: #{dqn_update_fused.1} parent=1 // pred_check_branch
      %30 = sbr.rel (%p28) target = $region29
    $region28: #{dqn_update_fused.1} parent=1 // pred_region
      %s31 = scalar_lea.smem [#allocation2], 0
      %32 = sst [smem:[%s31]] 0.0
      %v33 = vld [vmem:[%s4] sm:$0xff]
      %v34 = vld [vmem:[%s5] sm:$0xff]
      %v35 = vsub.f32 %v33, %v34
      %vm36 = vcmask 31744
      %v37 = vsel %vm36, %v35, 0.0
      %38 = vadd.xlane.f32.xlu0 %v37
      %v39 = vpop.xlane.xlu0 %38
      %v40 = vrot.slane %v39, 4
      %v41 = vadd.f32 %v39, %v40
      %v42 = vrot.slane %v41, 2
      %v43 = vadd.f32 %v41, %v42
      %v44 = vrot.slane %v43, 1
      %v45 = vadd.f32 %v43, %v44
      %s46 = vtos %v45
      %v47 = vrcp.pop 32.0
      %v48 = vmul.f32 32.0, %v47
      %v49 = vsub.f32 1.0, %v48
      %v50 = vmul.f32 %v47, %v49
      %v51 = vadd.f32 %v47, %v50
      %vm52 = vweird.f32 %v47
      %v53 = vsel %vm52, %v47, %v51
      %s54 = vtos %v53
      %s55 = smul.f32 %s46, %s54
      %v56 = vstv %s55
      %v57 = vsub.f32 %v35, %v56
      %v58 = vmul.f32 %v57, %v57
      %v59 = vsel %vm36, %v58, 0.0
      %60 = vadd.xlane.f32.xlu0 %v59
      %v61 = vpop.xlane.xlu0 %60
      %v62 = vrot.slane %v61, 4
      %v63 = vadd.f32 %v61, %v62
      %v64 = vrot.slane %v63, 2
      %v65 = vadd.f32 %v63, %v64
      %v66 = vrot.slane %v65, 1
      %v67 = vadd.f32 %v65, %v66
      %s68 = vtos %v67
      %v69 = vrcp.pop 31.0
      %v70 = vmul.f32 31.0, %v69
      %v71 = vsub.f32 1.0, %v70
      %v72 = vmul.f32 %v69, %v71
      %v73 = vadd.f32 %v69, %v72
      %vm74 = vweird.f32 %v69
      %v75 = vsel %vm74, %v69, %v73
      %s76 = vtos %v75
      %s77 = smul.f32 %s68, %s76
      %v78 = vstv %s77
      %v79 = vrsqrt.pop %v78
      %v80 = vmul.f32 %v79, %v78
      %v81 = vmul.f32 %v80, %v79
      %v82 = vmul.f32 0.5, %v81
      %v83 = vsub.f32 1.5, %v82
      %v84 = vmul.f32 %v79, %v83
      %v85 = vmul.f32 %v78, %v84
      %vm86 = vcmp.eq.f32.partialorder %v78, inf
      %v87 = vsel %vm86, %v78, %v85
      %vm88 = vcmp.eq.f32.partialorder %v78, 0.0
      %v89 = vand.u32 %v78, 2147483648
      %v90 = vsel %vm88, %v89, %v87
      %s91 = vtos %v90
      %s92 = sadd.f32 %s91, 1e-05
      %v93 = vstv %s92
      %v94 = vrcp.pop %v93
      %v95 = vmul.f32 %v93, %v94
      %v96 = vsub.f32 1.0, %v95
      %v97 = vmul.f32 %v94, %v96
      %v98 = vadd.f32 %v94, %v97
      %vm99 = vweird.f32 %v93
      %vm100 = vweird.f32 %v94
      %vm101 = vmor %vm99, %vm100
      %v102 = vsel %vm101, %v94, %v98
      %v103 = vand.u32 2147483647, %v93
      %vm104 = vcmp.eq.f32.partialorder %v103, 8.507059e+37
      %v105 = vand.u32 %v93, 2147483648
      %v106 = vor.u32 1.1754944e-38, %v105
      %v107 = vsel %vm104, %v106, %v102
      %v108 = vmul.f32 %v57, %v107
      %109 = vst.msk [vmem:[%s7] sm:$0xff] %vm36, %v108
    $region29: #{dqn_update_fused.1} parent=1 // pred_fallthru
      _
    %v110 = vld [vmem:[%s0] sm:$0xf]
    %v111 = vld [vmem:[%s0 + $0x4] sm:$0xf]
    %v112 = vld [vmem:[%s1] sm:$0xf]
    %v113 = vld [vmem:[%s1 + $0x4] sm:$0xf]
    %v114 = vld [vmem:[%s1 + $0x8] sm:$0xf]
    %v115 = vld [vmem:[%s1 + $0xc] sm:$0xf]
    %v116 = vld [vmem:[%s2] sm:$0x1]
    %v118 = vperm.slane %v116, 0
    %v122 = vunpack.c.l.b16 %v110
    %v123 = vunpack.c.l.b16 %v111
    %v124 = vpack.c.b16 %v123, %v122
    %v129 = vunpack.c.l.b16 %v112
    %v130 = vunpack.c.l.b16 %v113
    %v131 = vunpack.c.l.b16 %v114
    %v132 = vunpack.c.l.b16 %v115
    %v133 = vpack.c.b16 %v130, %v129
    %v134 = vpack.c.b16 %v132, %v131
    %vm137 = vcmask 261120
    %v139 = vsel %vm137, %v124, 0
    %141 = vmatpush.bf16.msra.mxu0 0
    %142 = vmatpush.bf16.msra.mxu0 0
    %143 = vmatpush.bf16.msra.mxu0 0
    %144 = vmatpush.bf16.msra.mxu0 0
    %145 = vmatpush.bf16.msra.mxu0 0
    %146 = vmatpush.bf16.msra.mxu0 0
    %147 = vmatpush.bf16.msra.mxu0 %v134
    %148 = vmatpush.bf16.msra.mxu0 %v133
    %149 = vmatmul.bf16.gmra.mxu0 %v139
    %v150 = vpop.f32.mrf.mxu0
    %v151 = vadd.f32 %v118, %v150
    %v152 = vpop.f32.mrf.mxu0
    %v153 = vadd.f32 %v118, %v152
    %154 = vdwg.mxu0
    %v155 = vld [vmem:[%s3] sm:$0xff]
    %v156 = vcvt.f32.s32.to.zero.pseudo %v155
    %v157 = vlaneseq
    %v158 = vand.u32 %v157, 127
    %159 = vset.pattern.permute.xlu0 0
    %160 = vperm.xlu0 %159, %v156
    %v161 = vpop.permute.xlu0 %160
    %vm162 = vcmp.eq.s32.totalorder %v158, %v161
    %v163 = vsel %vm162, %v151, 0.0
    %vm164 = vcmask 130048
    %v165 = vsel %vm164, %v163, 0.0
    %166 = vadd.xlane.f32.xlu0 %v165
    %v167 = vpop.xlane.xlu0 %166
    %vm168 = vcmp.ge.s32.totalorder %v158, 8
    %v169 = vsel %vm168, %v153, -inf
    %v170 = vsel %vm164, %v169, -inf
    %171 = vmax.xlane.f32.xlu0 %v170
    %v172 = vpop.xlane.xlu0 %171
    %v173 = vmul.f32 %v155, %v172
    %v174 = vmul.f32 %v173, 0.99
    %176 = vrot.lane.b32.xlu0 %v155, 1
    %v177 = vpop.permute.xlu0 %176
    %v179 = vadd.f32 %v174, %v177
    %v180 = vsub.f32 %v167, %v179
    %v181 = vand.u32 2147483647, %v180
    %vm182 = vcmp.lt.f32.partialorder %v181, 1.0
    %v183 = vmul.f32 %v180, 0.5
    %v184 = vmul.f32 %v183, %v180
    %v185 = vsub.f32 %v181, 0.5
    %v186 = vsel %vm182, %v184, %v185
    %s187 = sld [smem:[#allocation2]]
    %189 = vrot.lane.b32.xlu0 %v186, 126
    %v190 = vpop.permute.xlu0 %189
    %vm192 = vcmask 7168
    %v193 = vsel %vm192, %v190, 0.0
    %194 = vadd.xlane.f32.xlu0 %v193
    %v195 = vpop.xlane.xlu0 %194
    %v196 = vrot.slane %v195, 4
    %v197 = vadd.f32 %v195, %v196
    %v198 = vrot.slane %v197, 2
    %v199 = vadd.f32 %v197, %v198
    %v200 = vrot.slane %v199, 1
    %v201 = vadd.f32 %v199, %v200
    %s202 = vtos %v201
    %s203 = sadd.f32 %s187, %s202
    %s204 = scalar_lea.smem [#allocation2], 0
    %205 = sst [smem:[%s204]] %s203
    // Predicated region
    $region30: #{dqn_update_fused.1} parent=1 // pred_check
      %p206 = pneg %p27
    $region31: #{dqn_update_fused.1} parent=1 // pred_check_branch
      %208 = sbr.rel (%p206) target = $region33
    $region32: #{dqn_update_fused.1} parent=1 // pred_region
      %s209 = sld [smem:[#allocation2]]
      %v210 = vrcp.pop 8.0
      %v211 = vmul.f32 8.0, %v210
      %v212 = vsub.f32 1.0, %v211
      %v213 = vmul.f32 %v210, %v212
      %v214 = vadd.f32 %v210, %v213
      %vm215 = vweird.f32 %v210
      %v216 = vsel %vm215, %v210, %v214
      %s217 = vtos %v216
      %s218 = smul.f32 %s209, %s217
      %s219 = scalar_lea.smem [#allocation3], 0
      %220 = sst [smem:[%s219]] %s218
    $region33: #{dqn_update_fused.1} parent=1 // pred_fallthru
      _
    // Predicated region
    $region34: #{dqn_update_fused.1} parent=1 // pred_check
      _
    $region35: #{dqn_update_fused.1} parent=1 // pred_check_branch
      %222 = sbr.rel (0) target = $region37
    $region36: #{dqn_update_fused.1} parent=1 // pred_region
      %224 = vsyncadd [#allocation4], 0
      %s226 = sshll.u32 %s6, 4
      %s227 = int_to_ptr.hbm [resolvable:$true] %s226
      %229 = dma.smem_to_hbm [#allocation3], 16, %s227, [#allocation4]
    $region37: #{dqn_update_fused.1} parent=1 // pred_fallthru
      _
    // Predicated region
    $region38: #{dqn_update_fused.1} parent=1 // pred_check
      _
    $region39: #{dqn_update_fused.1} parent=1 // pred_check_branch
      %231 = sbr.rel (0) target = $region41
    $region40: #{dqn_update_fused.1} parent=1 // pred_region
      _
    $region41: #{dqn_update_fused.1} parent=1 // pred_fallthru
      _
    // Predicated region
    $region42: #{dqn_update_fused.1} parent=1 // pred_check
      _
    $region43: #{dqn_update_fused.1} parent=1 // pred_check_branch
      %233 = sbr.rel (0) target = $region45
    $region44: #{dqn_update_fused.1} parent=1 // pred_region
      %235 = dma.done [#allocation4], 16
    $region45: #{dqn_update_fused.1} parent=1 // pred_fallthru
      _
    // Predicated region
    $region46: #{dqn_update_fused.1} parent=1 // pred_check
      _
    $region47: #{dqn_update_fused.1} parent=1 // pred_check_branch
      %237 = sbr.rel (0) target = $region49
    $region48: #{dqn_update_fused.1} parent=1 // pred_region
      _
    $region49: #{dqn_update_fused.1} parent=1 // pred_fallthru
      _
    %238 = sfence
    %239 = vsyncpa [#allocation4], 1

</llo_original>
